<compile_context>
chip_gen: v5e
topology: v5e:2x2
jax: 0.10.0
libtpu: 0.0.40
codegen_flags: <defaults>
</compile_context>

<pallas_src>
import functools

import jax
import jax.numpy as jnp
from jax import lax
from jax.experimental import pallas as pl
from jax.experimental.pallas import tpu as pltpu


# --------------------------------------------------------------------------
# Small helpers
# --------------------------------------------------------------------------
def _round_up(v, m):
    return -(-v // m) * m


def _round_down(v, m):
    return (v // m) * m


def _single_buffered_spec(block_shape, index_map):
    """Grid-invariant operand: ask for single buffering (no double-buffer)."""
    try:
        return pl.BlockSpec(block_shape, index_map, pipeline_mode=pl.Buffered(1))
    except Exception:  # older jax without pipeline_mode kwarg
        return pl.BlockSpec(block_shape, index_map)


def _vmem_budget_bytes():
    """~80% of physical VMEM for this generation (conservative fallback)."""
    try:
        cap = pltpu.get_tpu_info().vmem_capacity_bytes
    except Exception:
        cap = 64 * 1024 * 1024  # v7x-sized fallback, safe everywhere
    return int(0.8 * cap)


def _pick_tile_b(batch, d_pad, resident_weight_bytes, vmem_budget):
    # Per-row VMEM: double-buffered x/out f32 tiles (2 bufs * 2 arrays) plus
    # ~4 live (row, 2*d_pad) f32 temporaries inside the layer body.
    per_row = 2 * 2 * d_pad * 4 + 4 * 2 * d_pad * 4
    avail = max(vmem_budget - resident_weight_bytes, per_row * 8)
    cap = min(avail // per_row, 2048)
    # Don't exceed the batch (rounded up to a sublane multiple).
    cap = min(cap, max(8, _round_up(batch, 8)))
    # Keep >=2 grid steps so v7x's two TensorCores both get work.
    if batch > 8:
        cap = min(cap, max(8, _round_up(-(-batch // 2), 8)))
    cap = max(cap, 8)
    # Prefer MXU-friendly row counts (256 on v6e/v7x, 128 on v5e), then 8.
    for m in (256, 128, 8):
        if cap >= m:
            return _round_down(cap, m)
    return 8


# --------------------------------------------------------------------------
# Parameter preparation (done ONCE, not per forward call)
# --------------------------------------------------------------------------
def prepare_highway_params(wt, bt, wg, bg, *, gate_bias_offset=-2.0):
    """Fuse transform + gate params into one (D, 2D) bf16 matmul per layer.

    wt/wg: (L, D, D) in (in, out) layout (transposed from PyTorch's (out,in));
    bt/bg: (L, D) or (L, 1, D). D is zero-padded to a multiple of 128 lanes.
    """
    L, D, _ = wt.shape
    bt = bt.reshape(L, 1, D).astype(jnp.float32)
    bg = bg.reshape(L, 1, D).astype(jnp.float32) + jnp.float32(gate_bias_offset)
    d_pad = _round_up(D, 128)
    if d_pad != D:
        pw = ((0, 0), (0, d_pad - D), (0, d_pad - D))
        pb = ((0, 0), (0, 0), (0, d_pad - D))
        wt = jnp.pad(wt, pw)
        wg = jnp.pad(wg, pw)
        bt = jnp.pad(bt, pb)
        bg = jnp.pad(bg, pb)  # padded rows stay exactly 0 through every layer
    w_fused = jnp.concatenate([wt, wg], axis=-1).astype(jnp.bfloat16)  # (L,Dp,2Dp)
    b_fused = jnp.concatenate([bt, bg], axis=-1).astype(jnp.float32)   # (L,1,2Dp)
    return {"w": w_fused, "b": b_fused, "size": D, "padded_size": d_pad}


# --------------------------------------------------------------------------
# Kernels
# --------------------------------------------------------------------------
def _highway_resident_kernel(x_ref, w_ref, b_ref, out_ref, *, num_layers, size):
    # x tile (TILE_B, Dp) in VMEM; w_ref full (L, Dp, 2Dp) bf16 stack
    # (single-buffered, grid-invariant); b_ref (L, 1, 2Dp) f32 with the gate
    # offset folded in.
    x0 = x_ref[...].astype(jnp.float32)

    def layer(l, x):
        w = w_ref[l]                      # (Dp, 2Dp) bf16
        b = b_ref[l]                      # (1, 2Dp)  f32
        fused = jnp.dot(x.astype(jnp.bfloat16), w,
                        preferred_element_type=jnp.float32) + b
        output = fused[:, :size]          # lane-aligned split (size % 128 == 0)
        gate = jax.nn.sigmoid(fused[:, size:])
        # gate*output + (1-gate)*x  ==  x + gate*(output - x)
        return x + gate * (output - x)

    if num_layers <= 8:
        x = x0
        for l in range(num_layers):       # static unroll for small L
            x = layer(l, x)
    else:
        # Deep stacks: bounded live ranges / code size via fori_loop.
        x = lax.fori_loop(0, num_layers, layer, x0)
    out_ref[...] = x.astype(out_ref.dtype)


def _highway_streaming_kernel(x_ref, w_ref, b_ref, out_ref, x_scratch, *, size):
    # grid = (batch_tiles, L); one (1, Dp, 2Dp) weight block streamed per
    # layer step (double-buffered => next layer's weights DMA under this
    # layer's MXU work). Running x lives in a VMEM scratch accumulator.
    l = pl.program_id(1)

    @pl.when(l == 0)
    def _():
        x_scratch[...] = x_ref[...].astype(jnp.float32)

    x = x_scratch[...]
    w = w_ref[0]                          # (Dp, 2Dp) bf16
    b = b_ref[0]                          # (1, 2Dp)  f32
    fused = jnp.dot(x.astype(jnp.bfloat16), w,
                    preferred_element_type=jnp.float32) + b
    output = fused[:, :size]
    gate = jax.nn.sigmoid(fused[:, size:])
    x = x + gate * (output - x)
    x_scratch[...] = x

    @pl.when(l == pl.num_programs(1) - 1)
    def _():
        out_ref[...] = x.astype(out_ref.dtype)


# --------------------------------------------------------------------------
# Wrapper
# --------------------------------------------------------------------------
def highway_forward(x, params, *, tile_b=None, force_stream=False):
    """x: (B, D) float; params from prepare_highway_params. Returns (B, D)."""
    B, D = x.shape
    assert D == params["size"], (D, params["size"])
    w, b = params["w"], params["b"]
    L, d_pad, two_d = w.shape

    budget = _vmem_budget_bytes()
    weight_bytes = w.size * w.dtype.itemsize + b.size * b.dtype.itemsize

    # Stream one layer's weights per grid step when the resident stack would
    # eat too much VMEM (critical on v7x's 64 MiB).
    stream = force_stream or (weight_bytes > budget // 3)
    if stream:
        # two layer blocks (double-buffered) resident at a time
        resident_w = 2 * (d_pad * two_d * 2 + two_d * 4)
    else:
        resident_w = weight_bytes  # single-buffered full stack

    if tile_b is None:
        tile_b = _pick_tile_b(B, d_pad, resident_w, budget)
    grid_b = pl.cdiv(B, tile_b)  # partial last block is clipped by Pallas

    # VMEM estimate now includes in-kernel f32 intermediates.
    est = (resident_w
           + 2 * 2 * tile_b * d_pad * 4          # double-buffered x/out tiles
           + 4 * tile_b * two_d * 4)             # live f32 temporaries
    if stream:
        est += tile_b * d_pad * 4                # running-x scratch
    vmem_limit = int(min(budget, max(2 * est, 32 * 1024 * 1024)))

    # Zero-pad activations to the lane-aligned width (no-op when D % 128 == 0).
    x_in = jnp.pad(x, ((0, 0), (0, d_pad - D))) if d_pad != D else x
    out_shape = jax.ShapeDtypeStruct((B, d_pad), x.dtype)

    if stream:
        kernel = functools.partial(_highway_streaming_kernel, size=d_pad)
        out_pad = pl.pallas_call(
            kernel,
            out_shape=out_shape,
            grid=(grid_b, L),
            in_specs=[
                pl.BlockSpec((tile_b, d_pad), lambda i, l: (i, 0)),
                pl.BlockSpec((1, d_pad, two_d), lambda i, l: (l, 0, 0)),
                pl.BlockSpec((1, 1, two_d), lambda i, l: (l, 0, 0)),
            ],
            out_specs=pl.BlockSpec((tile_b, d_pad), lambda i, l: (i, 0)),
            scratch_shapes=[pltpu.VMEM((tile_b, d_pad), jnp.float32)],
            compiler_params=pltpu.CompilerParams(
                dimension_semantics=("parallel", "arbitrary"),
                vmem_limit_bytes=vmem_limit,
            ),
        )(x_in, w, b)
    else:
        kernel = functools.partial(_highway_resident_kernel,
                                   num_layers=L, size=d_pad)
        out_pad = pl.pallas_call(
            kernel,
            out_shape=out_shape,
            grid=(grid_b,),
            in_specs=[
                pl.BlockSpec((tile_b, d_pad), lambda i: (i, 0)),
                _single_buffered_spec((L, d_pad, two_d), lambda i: (0, 0, 0)),
                _single_buffered_spec((L, 1, two_d), lambda i: (0, 0, 0)),
            ],
            out_specs=pl.BlockSpec((tile_b, d_pad), lambda i: (i, 0)),
            compiler_params=pltpu.CompilerParams(
                dimension_semantics=("parallel",),
                vmem_limit_bytes=vmem_limit,
            ),
        )(x_in, w, b)

    return out_pad[:, :D] if d_pad != D else out_pad


# --------------------------------------------------------------------------
# Pure-JAX f32 reference (matches the PyTorch forward)
# --------------------------------------------------------------------------
def highway_reference(x, wt, bt, wg, bg, *, gate_bias_offset=-2.0):
    x = x.astype(jnp.float32)
    for l in range(wt.shape[0]):
        output = x @ wt[l] + bt[l]
        gate = jax.nn.sigmoid(x @ wg[l] + bg[l] + gate_bias_offset)
        x = gate * output + (1.0 - gate) * x
    return x


# --------------------------------------------------------------------------
# Demo / self-test
# --------------------------------------------------------------------------
def _make_params(key, num_layers, size):
    kwt, kbt, kwg, kbg = jax.random.split(key, 4)
    bound = 1.0 / jnp.sqrt(size)
    # PyTorch stores W as (out, in); we build the transposed (in, out) layout
    # directly, which is what the kernel consumes (x @ W).
    wt = jax.random.uniform(kwt, (num_layers, size, size), jnp.float32, -bound, bound)
    bt = jax.random.uniform(kbt, (num_layers, 1, size), jnp.float32, -bound, bound)
    wg = jax.random.uniform(kwg, (num_layers, size, size), jnp.float32, -bound, bound)
    bg = jax.random.uniform(kbg, (num_layers, 1, size), jnp.float32, -bound, bound)
    return wt, bt, wg, bg


if __name__ == "__main__":
    # Small shapes consistent with HighwayNetwork(size=32, num_layers=2).
    batch, size, num_layers = 16, 32, 2
    gate_bias_offset = -2.0

    key = jax.random.PRNGKey(0)
    kx, kp, kp_deep = jax.random.split(key, 3)
    x = jax.random.normal(kx, (batch, size), dtype=jnp.float32)
    wt, bt, wg, bg = _make_params(kp, num_layers, size)

    params = prepare_highway_params(wt, bt, wg, bg,
                                    gate_bias_offset=gate_bias_offset)
    ref = highway_reference(x, wt, bt, wg, bg, gate_bias_offset=gate_bias_offset)

    # 1) Resident-weight path (auto-selected at these sizes).
    out = jax.block_until_ready(highway_forward(x, params))
    assert out.shape == (batch, size)
    assert jnp.allclose(out, ref, atol=5e-2, rtol=5e-2), "resident path mismatch"

    # 2) Layer-streaming path (forced here; auto-selected when the weight
    #    stack exceeds ~1/3 of VMEM, e.g. large L*D on v7x).
    out_s = jax.block_until_ready(highway_forward(x, params, force_stream=True))
    assert jnp.allclose(out_s, ref, atol=5e-2, rtol=5e-2), "streaming path mismatch"

    # 3) Deep stack exercises the fori_loop layer loop (num_layers > 8).
    deep_layers = 10
    wt2, bt2, wg2, bg2 = _make_params(kp_deep, deep_layers, size)
    params2 = prepare_highway_params(wt2, bt2, wg2, bg2,
                                     gate_bias_offset=gate_bias_offset)
    ref2 = highway_reference(x, wt2, bt2, wg2, bg2,
                             gate_bias_offset=gate_bias_offset)
    out2 = jax.block_until_ready(highway_forward(x, params2))
    assert jnp.allclose(out2, ref2, atol=1e-1, rtol=1e-1), "deep path mismatch"

    print("KERNEL_OK")
</pallas_src>

<mosaic_0001>
module attributes {stable_mosaic.version = 11 : i64} {
  func.func @_highway_resident_kernel(%arg0: i32, %arg1: memref<8x128xf32, #tpu.memory_space<vmem>>, %arg2: memref<2x128x256xbf16, #tpu.memory_space<vmem>>, %arg3: memref<2x1x256xf32, #tpu.memory_space<vmem>>, %arg4: memref<8x128xf32, #tpu.memory_space<vmem>>) attributes {dimension_semantics = [#tpu.dimension_semantics<parallel>], iteration_bounds = array<i64: 2>, scalar_prefetch = 0 : i64, scratch_operands = 0 : i64, tpu.core_type = #tpu.core_type<tc>, window_params = [{transform_indices = @transform_0, window_bounds = array<i64: 8, 128>}, {pipeline_mode = #tpu.pipeline_mode<synchronous>, transform_indices = @transform_1, window_bounds = array<i64: 2, 128, 256>}, {pipeline_mode = #tpu.pipeline_mode<synchronous>, transform_indices = @transform_2, window_bounds = array<i64: 2, 1, 256>}, {transform_indices = @transform_3, window_bounds = array<i64: 8, 128>}]} {
    %c0 = arith.constant 0 : index
    %c0_0 = arith.constant 0 : index
    %0 = vector.load %arg1[%c0, %c0_0] : memref<8x128xf32, #tpu.memory_space<vmem>>, vector<8x128xf32>
    %c0_1 = arith.constant 0 : index
    %c0_2 = arith.constant 0 : index
    %c0_3 = arith.constant 0 : index
    %1 = vector.load %arg2[%c0_1, %c0_2, %c0_3] : memref<2x128x256xbf16, #tpu.memory_space<vmem>>, vector<1x128x256xbf16>
    %2 = vector.shape_cast %1 : vector<1x128x256xbf16> to vector<128x256xbf16>
    %c0_4 = arith.constant 0 : index
    %c0_5 = arith.constant 0 : index
    %c0_6 = arith.constant 0 : index
    %3 = vector.load %arg3[%c0_4, %c0_5, %c0_6] : memref<2x1x256xf32, #tpu.memory_space<vmem>>, vector<1x1x256xf32>
    %4 = vector.shape_cast %3 : vector<1x1x256xf32> to vector<1x256xf32>
    %5 = arith.truncf %0 : vector<8x128xf32> to vector<8x128xbf16>
    %cst = arith.constant dense<0.000000e+00> : vector<8x256xf32>
    %6 = tpu.matmul %5, %2, %cst {dimension_numbers = #tpu.dot_dimension_numbers<[1], [0], [0], [1], [0, 0, 1, 1], [], []>} : vector<8x128xbf16>, vector<128x256xbf16>, vector<8x256xf32> -> vector<8x256xf32>
    %7 = vector.broadcast %4 : vector<1x256xf32> to vector<8x256xf32>
    %8 = arith.addf %6, %7 : vector<8x256xf32>
    %9 = vector.extract_strided_slice %8 {offsets = [0, 0], sizes = [8, 128], strides = [1, 1]} : vector<8x256xf32> to vector<8x128xf32>
    %10 = vector.extract_strided_slice %8 {offsets = [0, 128], sizes = [8, 128], strides = [1, 1]} : vector<8x256xf32> to vector<8x128xf32>
    %11 = arith.negf %10 : vector<8x128xf32>
    %12 = math.exp %11 : vector<8x128xf32>
    %cst_7 = arith.constant 1.000000e+00 : f32
    %13 = vector.broadcast %cst_7 : f32 to vector<8x128xf32>
    %14 = arith.addf %13, %12 : vector<8x128xf32>
    %15 = arith.divf %13, %14 : vector<8x128xf32>
    %16 = arith.subf %9, %0 : vector<8x128xf32>
    %17 = arith.mulf %15, %16 : vector<8x128xf32>
    %18 = arith.addf %0, %17 : vector<8x128xf32>
    %c1 = arith.constant 1 : index
    %c0_8 = arith.constant 0 : index
    %c0_9 = arith.constant 0 : index
    %19 = vector.load %arg2[%c1, %c0_8, %c0_9] : memref<2x128x256xbf16, #tpu.memory_space<vmem>>, vector<1x128x256xbf16>
    %20 = vector.shape_cast %19 : vector<1x128x256xbf16> to vector<128x256xbf16>
    %c1_10 = arith.constant 1 : index
    %c0_11 = arith.constant 0 : index
    %c0_12 = arith.constant 0 : index
    %21 = vector.load %arg3[%c1_10, %c0_11, %c0_12] : memref<2x1x256xf32, #tpu.memory_space<vmem>>, vector<1x1x256xf32>
    %22 = vector.shape_cast %21 : vector<1x1x256xf32> to vector<1x256xf32>
    %23 = arith.truncf %18 : vector<8x128xf32> to vector<8x128xbf16>
    %cst_13 = arith.constant dense<0.000000e+00> : vector<8x256xf32>
    %24 = tpu.matmul %23, %20, %cst_13 {dimension_numbers = #tpu.dot_dimension_numbers<[1], [0], [0], [1], [0, 0, 1, 1], [], []>} : vector<8x128xbf16>, vector<128x256xbf16>, vector<8x256xf32> -> vector<8x256xf32>
    %25 = vector.broadcast %22 : vector<1x256xf32> to vector<8x256xf32>
    %26 = arith.addf %24, %25 : vector<8x256xf32>
    %27 = vector.extract_strided_slice %26 {offsets = [0, 0], sizes = [8, 128], strides = [1, 1]} : vector<8x256xf32> to vector<8x128xf32>
    %28 = vector.extract_strided_slice %26 {offsets = [0, 128], sizes = [8, 128], strides = [1, 1]} : vector<8x256xf32> to vector<8x128xf32>
    %29 = arith.negf %28 : vector<8x128xf32>
    %30 = math.exp %29 : vector<8x128xf32>
    %cst_14 = arith.constant 1.000000e+00 : f32
    %31 = vector.broadcast %cst_14 : f32 to vector<8x128xf32>
    %32 = arith.addf %31, %30 : vector<8x128xf32>
    %33 = arith.divf %31, %32 : vector<8x128xf32>
    %34 = arith.subf %27, %18 : vector<8x128xf32>
    %35 = arith.mulf %33, %34 : vector<8x128xf32>
    %36 = arith.addf %18, %35 : vector<8x128xf32>
    %c0_15 = arith.constant 0 : index
    %c0_16 = arith.constant 0 : index
    %37 = vector.load %arg4[%c0_15, %c0_16] : memref<8x128xf32, #tpu.memory_space<vmem>>, vector<8x128xf32>
    tpu.vector_store %arg4[%c0_15, %c0_16], %36 {strides = array<i32>} : memref<8x128xf32, #tpu.memory_space<vmem>>, vector<8x128xf32>,
    return
  }
  func.func @transform_0(%arg0: i32) -> (i32, i32) {
    %c0_i32 = arith.constant 0 : i32
    %c0_i32_0 = arith.constant 0 : i32
    return %arg0, %c0_i32 : i32, i32
  }
  func.func @transform_1(%arg0: i32) -> (i32, i32, i32) {
    %c0_i32 = arith.constant 0 : i32
    %c0_i32_0 = arith.constant 0 : i32
    %c0_i32_1 = arith.constant 0 : i32
    %c0_i32_2 = arith.constant 0 : i32
    return %c0_i32, %c0_i32_0, %c0_i32_1 : i32, i32, i32
  }
  func.func @transform_2(%arg0: i32) -> (i32, i32, i32) {
    %c0_i32 = arith.constant 0 : i32
    %c0_i32_0 = arith.constant 0 : i32
    %c0_i32_1 = arith.constant 0 : i32
    %c0_i32_2 = arith.constant 0 : i32
    return %c0_i32, %c0_i32_0, %c0_i32_1 : i32, i32, i32
  }
  func.func @transform_3(%arg0: i32) -> (i32, i32) {
    %c0_i32 = arith.constant 0 : i32
    %c0_i32_0 = arith.constant 0 : i32
    return %arg0, %c0_i32 : i32, i32
  }
}

</mosaic_0001>

<llo_original>
// kernel: tpu_custom_call.1
$region0: #{tpu_custom_call.1}
  #allocation0 [shape = 'u32[]', space=smem, size = 0x4, offset = 0x4, fixed_abs, tag = 'smem constant byte address 0x4 - core index']
  #allocation1 [shape = 'u32[72,128]{1,0:T(1,128)}', space=vmem, size = 0x9000, scoped, tag = 'internal scratch']
  %s0 = inlined_call_operand.hbm [shape: f32[16,128], index: 0, kind: input, shape index: {}]
  %s1 = inlined_call_operand.hbm [shape: bf16[2,128,256], index: 1, kind: input, shape index: {}]
  %s2 = inlined_call_operand.hbm [shape: f32[2,1,256], index: 2, kind: input, shape index: {}]
  %s3 = inlined_call_operand.hbm [shape: f32[16,128], index: 3, kind: output, shape index: {}]
  %s4 = sld [smem:[#allocation0]]
  $region57: #{tpu_custom_call.1} parent=0
    _
  %s6 = ssub.s32 1, %s4
  %s7 = scalar_select 0, %s6, %s4
  $region1: #{tpu_custom_call.1} parent=0
    #allocation2 [shape = 'u8[8192]{0}', space=vmem, size = 0x2000, scoped, tag = 'input window, operand 0']
    #allocation3 [shape = 's32[2]{0}', space=sflag, size = 0x8, scoped, tag = 'scoped memory for tpu_custom_call.1']
    #allocation4 [shape = 's32[2]{0}', space=sflag, size = 0x8, scoped, tag = 'scoped memory for tpu_custom_call.1']
    #allocation5 [shape = 'u8[131072]{0}', space=vmem, size = 0x20000, scoped, tag = 'input window, operand 1, single buffered']
    #allocation6 [shape = 's32[1]{0}', space=sflag, size = 0x4, scoped, tag = 'scoped memory for tpu_custom_call.1']
    #allocation7 [shape = 'u8[2048]{0}', space=vmem, size = 0x800, scoped, tag = 'input window, operand 2, single buffered']
    #allocation8 [shape = 'u8[8192]{0}', space=vmem, size = 0x2000, scoped, tag = 'output window, operand 0']
    %8 = vsyncpa [#allocation3], 0
    %s9 = scalar_lea.sflag [#allocation3], 1
    %10 = vsyncpa %s9, 0
    %11 = vsyncpa [#allocation6], 0
    %12 = vsyncpa [#allocation4], 0
    %s13 = scalar_lea.sflag [#allocation4], 1
    %14 = vsyncpa %s13, 0
    loop: start=0, step=1, limit=4
    $region2: #{tpu_custom_call.1} parent=1 // loop_pre_header
      _
    $region3: #{tpu_custom_call.1} parent=1 // loop_header
      %s16 = sphi 0, %s20
      %p17 = scmp.ge.s32.totalorder %s16, 4
      %s26 = sphi 0, %s28
      %s29 = sphi 0, %s26
      %s30 = sphi 0, %s29
      %s46 = sphi 0, %s30
      %s50 = sphi 0, %s50
      %s52 = sphi 0, %s50
      %s53 = sphi 0, %s52
      %s67 = sphi 0, %s53
      %s71 = sphi 0, %s71
      %s73 = sphi 0, %s71
      %s74 = sphi 0, %s73
      %s88 = sphi 0, %s74
      %s94 = sphi 0, %s96
      %s97 = sphi 0, %s94
      %s98 = sphi 0, %s97
      %s114 = sphi 0, %s98
    $region4: #{tpu_custom_call.1} parent=1 // loop_header_branch
      %19 = sbr.rel (%p17) target = $region8
    $region5: #{tpu_custom_call.1} parent=1 // loop_body
      %s21 = ssub.s32 %s16, 1
      %s22 = ssub.s32 %s16, 2
      %s23 = sadd.s32 %s16, 1
      %s24 = ssub.s32 %s16, %s23
      %p25 = scmp.eq.s32.totalorder %s24, 0
      %s27 = sadd.s32 %s26, 1
      %s28 = scalar_select %p25, %s26, %s27
      %p31 = pneg %p25
      %p32 = scmp.eq.s32.totalorder %s16, 1
      %p33 = por %p31, %p32
      %p34 = scmp.ne.s32.totalorder %s26, %s29
      %p35 = scmp.eq.s32.totalorder %s16, 0
      %p36 = por %p34, %p35
      %p37 = scmp.ne.s32.totalorder %s26, %s29
      %p38 = scmp.eq.s32.totalorder %s21, 1
      %p39 = por %p37, %p38
      %p40 = scmp.ne.s32.totalorder %s29, %s30
      %p41 = scmp.eq.s32.totalorder %s21, 0
      %p42 = por %p40, %p41
      %p43 = scmp.ne.s32.totalorder %s29, %s30
      %p44 = scmp.eq.s32.totalorder %s22, 1
      %p45 = por %p43, %p44
      %p47 = scmp.ne.s32.totalorder %s30, %s46
      %p48 = scmp.eq.s32.totalorder %s22, 0
      %p49 = por %p47, %p48
      %s51 = sadd.s32 %s50, 1
      %p54 = scmp.eq.s32.totalorder %s16, 1
      %p55 = scmp.ne.s32.totalorder %s50, %s52
      %p56 = scmp.eq.s32.totalorder %s16, 0
      %p57 = por %p55, %p56
      %p58 = scmp.ne.s32.totalorder %s50, %s52
      %p59 = scmp.eq.s32.totalorder %s21, 1
      %p60 = por %p58, %p59
      %p61 = scmp.ne.s32.totalorder %s52, %s53
      %p62 = scmp.eq.s32.totalorder %s21, 0
      %p63 = por %p61, %p62
      %p64 = scmp.ne.s32.totalorder %s52, %s53
      %p65 = scmp.eq.s32.totalorder %s22, 1
      %p66 = por %p64, %p65
      %p68 = scmp.ne.s32.totalorder %s53, %s67
      %p69 = scmp.eq.s32.totalorder %s22, 0
      %p70 = por %p68, %p69
      %s72 = sadd.s32 %s71, 1
      %p75 = scmp.eq.s32.totalorder %s16, 1
      %p76 = scmp.ne.s32.totalorder %s71, %s73
      %p77 = scmp.eq.s32.totalorder %s16, 0
      %p78 = por %p76, %p77
      %p79 = scmp.ne.s32.totalorder %s71, %s73
      %p80 = scmp.eq.s32.totalorder %s21, 1
      %p81 = por %p79, %p80
      %p82 = scmp.ne.s32.totalorder %s73, %s74
      %p83 = scmp.eq.s32.totalorder %s21, 0
      %p84 = por %p82, %p83
      %p85 = scmp.ne.s32.totalorder %s73, %s74
      %p86 = scmp.eq.s32.totalorder %s22, 1
      %p87 = por %p85, %p86
      %p89 = scmp.ne.s32.totalorder %s74, %s88
      %p90 = scmp.eq.s32.totalorder %s22, 0
      %p91 = por %p89, %p90
      %s92 = ssub.s32 %s16, %s23
      %p93 = scmp.eq.s32.totalorder %s92, 0
      %s95 = sadd.s32 %s94, 1
      %s96 = scalar_select %p93, %s94, %s95
      %p99 = pneg %p93
      %p100 = scmp.eq.s32.totalorder %s16, 1
      %p101 = por %p99, %p100
      %p102 = scmp.ne.s32.totalorder %s94, %s97
      %p103 = scmp.eq.s32.totalorder %s16, 0
      %p104 = por %p102, %p103
      %p105 = scmp.ne.s32.totalorder %s94, %s97
      %p106 = scmp.eq.s32.totalorder %s21, 1
      %p107 = por %p105, %p106
      %p108 = scmp.ne.s32.totalorder %s97, %s98
      %p109 = scmp.eq.s32.totalorder %s21, 0
      %p110 = por %p108, %p109
      %p111 = scmp.ne.s32.totalorder %s97, %s98
      %p112 = scmp.eq.s32.totalorder %s22, 1
      %p113 = por %p111, %p112
      %p115 = scmp.ne.s32.totalorder %s98, %s114
      %p116 = scmp.eq.s32.totalorder %s22, 0
      %p117 = por %p115, %p116
      %p118 = scmp.le.s32.totalorder 1, %s16
      %p119 = scmp.lt.s32.totalorder %s16, 3
      %p120 = pnand %p118, %p119
      %p121 = pneg %p120
      // Predicated region
      $region9: #{tpu_custom_call.1} parent=5 // pred_check
        _
      $region10: #{tpu_custom_call.1} parent=5 // pred_check_branch
        %123 = sbr.rel (%p120) target = $region12
      $region11: #{tpu_custom_call.1} parent=5 // pred_region
        %s124 = ssub.s32 %s16, 1
        // Predicated region
        $region13: #{tpu_custom_call.1} parent=11 // pred_check
          %p125 = pneg %p63
        $region14: #{tpu_custom_call.1} parent=11 // pred_check_branch
          %127 = sbr.rel (%p125) target = $region16
        $region15: #{tpu_custom_call.1} parent=11 // pred_region
          %129 = vsyncadd [#allocation6], 0
          %s130 = sshll.u32 %s1, 4
          %s131 = int_to_ptr.hbm [resolvable:$true] %s130
          %s132 = sshll.u32 [#allocation5], 4
          %s133 = int_to_ptr.vmem [resolvable:$true] %s132
          %138 = dma.hbm_to_vmem [thread:$0]  %s131, 4096, %s133, [#allocation6], 128, 128, 8
        $region16: #{tpu_custom_call.1} parent=11 // pred_fallthru
          _
        // Predicated region
        $region17: #{tpu_custom_call.1} parent=11 // pred_check
          %p139 = pneg %p84
        $region18: #{tpu_custom_call.1} parent=11 // pred_check_branch
          %141 = sbr.rel (%p139) target = $region20
        $region19: #{tpu_custom_call.1} parent=11 // pred_region
          %143 = vsyncadd [#allocation6], 0
          %s144 = sshll.u32 %s2, 4
          %s145 = int_to_ptr.hbm [resolvable:$true] %s144
          %s146 = sshll.u32 [#allocation7], 4
          %s147 = int_to_ptr.vmem [resolvable:$true] %s146
          %152 = dma.hbm_to_vmem [thread:$0]  %s145, 64, %s147, [#allocation6], 32, 32, 2
        $region20: #{tpu_custom_call.1} parent=11 // pred_fallthru
          _
      $region12: #{tpu_custom_call.1} parent=5 // pred_fallthru
        _
      %p153 = scmp.lt.s32.totalorder %s16, 2
      // Predicated region
      $region21: #{tpu_custom_call.1} parent=5 // pred_check
        %p154 = pneg %p153
      $region22: #{tpu_custom_call.1} parent=5 // pred_check_branch
        %156 = sbr.rel (%p154) target = $region24
      $region23: #{tpu_custom_call.1} parent=5 // pred_region
        // Predicated region
        $region25: #{tpu_custom_call.1} parent=23 // pred_check
          %p157 = pneg %p36
        $region26: #{tpu_custom_call.1} parent=23 // pred_check_branch
          %159 = sbr.rel (%p157) target = $region28
        $region27: #{tpu_custom_call.1} parent=23 // pred_region
          %s160 = sand.u32 %s26, 1
          %s161 = scalar_lea.sflag [#allocation3], %s160
          %s162 = sand.u32 %s26, 1
          %s163 = smul.addr %s162, 8
          %s164 = scalar_lea.vmem [#allocation2], %s163
          %166 = vsyncadd %s161, 0
          %s167 = smul.addr %s16, 8
          %s168 = scalar_lea.hbm %s0, %s167
          %s170 = sshll.u32 %s168, 4
          %s171 = int_to_ptr.hbm [resolvable:$true] %s170
          %s172 = sshll.u32 %s164, 4
          %s173 = int_to_ptr.vmem [resolvable:$true] %s172
          %175 = dma.hbm_to_vmem [thread:$0]  %s171, 128, %s173, %s161
        $region28: #{tpu_custom_call.1} parent=23 // pred_fallthru
          _
      $region24: #{tpu_custom_call.1} parent=5 // pred_fallthru
        _
      %p176 = scmp.le.s32.totalorder 1, %s16
      %p177 = scmp.lt.s32.totalorder %s16, 3
      %p178 = pnand %p176, %p177
      %p179 = pneg %p178
      // Predicated region
      $region29: #{tpu_custom_call.1} parent=5 // pred_check
        _
      $region30: #{tpu_custom_call.1} parent=5 // pred_check_branch
        %181 = sbr.rel (%p178) target = $region32
      $region31: #{tpu_custom_call.1} parent=5 // pred_region
        %s182 = ssub.s32 %s16, 1
        %s183 = sand.u32 %s29, 1
        %s184 = scalar_lea.sflag [#allocation3], %s183
        %s185 = sand.u32 %s29, 1
        %s186 = smul.addr %s185, 8
        %s187 = scalar_lea.vmem [#allocation2], %s186
        // Predicated region
        $region33: #{tpu_custom_call.1} parent=31 // pred_check
          %p188 = pneg %p42
        $region34: #{tpu_custom_call.1} parent=31 // pred_check_branch
          %190 = sbr.rel (%p188) target = $region36
        $region35: #{tpu_custom_call.1} parent=31 // pred_region
          %192 = dma.done %s184, 128
        $region36: #{tpu_custom_call.1} parent=31 // pred_fallthru
          _
        // Predicated region
        $region37: #{tpu_custom_call.1} parent=31 // pred_check
          %p193 = pneg %p63
        $region38: #{tpu_custom_call.1} parent=31 // pred_check_branch
          %195 = sbr.rel (%p193) target = $region40
        $region39: #{tpu_custom_call.1} parent=31 // pred_region
          %197 = dma.done [#allocation6], 4096
        $region40: #{tpu_custom_call.1} parent=31 // pred_fallthru
          _
        // Predicated region
        $region41: #{tpu_custom_call.1} parent=31 // pred_check
          %p198 = pneg %p84
        $region42: #{tpu_custom_call.1} parent=31 // pred_check_branch
          %200 = sbr.rel (%p198) target = $region44
        $region43: #{tpu_custom_call.1} parent=31 // pred_region
          %202 = dma.done [#allocation6], 64
        $region44: #{tpu_custom_call.1} parent=31 // pred_fallthru
          _
        %s203 = sand.u32 %s29, 1
        %s204 = scalar_lea.sflag [#allocation3], %s203
        %s205 = sand.u32 %s29, 1
        %s206 = smul.addr %s205, 8
        %s207 = scalar_lea.vmem [#allocation2], %s206
        %p208 = pneg %p42
        %p209 = pneg %p39
        %p210 = pneg %p63
        %p211 = pneg %p60
        %p212 = pneg %p84
        %p213 = pneg %p81
        %p214 = pneg %p110
        %p215 = pneg %p107
        %s216 = sand.u32 %s97, 1
        %s217 = scalar_lea.sflag [#allocation4], %s216
        %s218 = sand.u32 %s97, 1
        %s219 = smul.addr %s218, 8
        %s220 = scalar_lea.vmem [#allocation8], %s219
        %v221 = vld [vmem:[%s187] sm:$0xff]
        %v222 = vld [vmem:[#allocation5] sm:$0xff]
        %v223 = vld [vmem:[#allocation5 + $0x8] sm:$0xff]
        %v224 = vld [vmem:[#allocation5 + $0x10] sm:$0xff]
        %v225 = vld [vmem:[#allocation5 + $0x18] sm:$0xff]
        %v226 = vld [vmem:[#allocation5 + $0x20] sm:$0xff]
        %v227 = vld [vmem:[#allocation5 + $0x28] sm:$0xff]
        %v228 = vld [vmem:[#allocation5 + $0x30] sm:$0xff]
        %v229 = vld [vmem:[#allocation5 + $0x38] sm:$0xff]
        %v230 = vld [vmem:[#allocation5 + $0x40] sm:$0xff]
        %v231 = vld [vmem:[#allocation5 + $0x48] sm:$0xff]
        %v232 = vld [vmem:[#allocation5 + $0x50] sm:$0xff]
        %v233 = vld [vmem:[#allocation5 + $0x58] sm:$0xff]
        %v234 = vld [vmem:[#allocation5 + $0x60] sm:$0xff]
        %v235 = vld [vmem:[#allocation5 + $0x68] sm:$0xff]
        %v236 = vld [vmem:[#allocation5 + $0x70] sm:$0xff]
        %v237 = vld [vmem:[#allocation5 + $0x78] sm:$0xff]
        %v238 = vld [vmem:[#allocation7] sm:$0x3]
        %v239 = vpack.c.bf16 %v221, %v221
        %v241 = vperm.slane %v238, 0
        %v242 = vperm.slane %v238, 1
        %v261 = vunpack.c.l.b16 %v222
        %v262 = vunpack.c.h.b16 %v222
        %v263 = vunpack.c.l.b16 %v223
        %v264 = vunpack.c.h.b16 %v223
        %v265 = vunpack.c.l.b16 %v224
        %v266 = vunpack.c.h.b16 %v224
        %v267 = vunpack.c.l.b16 %v225
        %v268 = vunpack.c.h.b16 %v225
        %v269 = vunpack.c.l.b16 %v226
        %v270 = vunpack.c.h.b16 %v226
        %v271 = vunpack.c.l.b16 %v227
        %v272 = vunpack.c.h.b16 %v227
        %v273 = vunpack.c.l.b16 %v228
        %v274 = vunpack.c.h.b16 %v228
        %v275 = vunpack.c.l.b16 %v229
        %v276 = vunpack.c.h.b16 %v229
        %v277 = vunpack.c.l.b16 %v230
        %v278 = vunpack.c.h.b16 %v230
        %v279 = vunpack.c.l.b16 %v231
        %v280 = vunpack.c.h.b16 %v231
        %v281 = vunpack.c.l.b16 %v232
        %v282 = vunpack.c.h.b16 %v232
        %v283 = vunpack.c.l.b16 %v233
        %v284 = vunpack.c.h.b16 %v233
        %v285 = vunpack.c.l.b16 %v234
        %v286 = vunpack.c.h.b16 %v234
        %v287 = vunpack.c.l.b16 %v235
        %v288 = vunpack.c.h.b16 %v235
        %v289 = vunpack.c.l.b16 %v236
        %v290 = vunpack.c.h.b16 %v236
        %v291 = vunpack.c.l.b16 %v237
        %v292 = vunpack.c.h.b16 %v237
        %v293 = vpack.c.b16 %v263, %v261
        %v294 = vpack.c.b16 %v264, %v262
        %v295 = vpack.c.b16 %v267, %v265
        %v296 = vpack.c.b16 %v268, %v266
        %v297 = vpack.c.b16 %v271, %v269
        %v298 = vpack.c.b16 %v272, %v270
        %v299 = vpack.c.b16 %v275, %v273
        %v300 = vpack.c.b16 %v276, %v274
        %v301 = vpack.c.b16 %v279, %v277
        %v302 = vpack.c.b16 %v280, %v278
        %v303 = vpack.c.b16 %v283, %v281
        %v304 = vpack.c.b16 %v284, %v282
        %v305 = vpack.c.b16 %v287, %v285
        %v306 = vpack.c.b16 %v288, %v286
        %v307 = vpack.c.b16 %v291, %v289
        %v308 = vpack.c.b16 %v292, %v290
        %325 = vmatpush.bf16.msra.mxu0 %v307
        %326 = vmatpush.bf16.msra.mxu0 %v305
        %327 = vmatpush.bf16.msra.mxu0 %v303
        %328 = vmatpush.bf16.msra.mxu0 %v301
        %329 = vmatpush.bf16.msra.mxu0 %v299
        %330 = vmatpush.bf16.msra.mxu0 %v297
        %331 = vmatpush.bf16.msra.mxu0 %v295
        %332 = vmatpush.bf16.msra.mxu0 %v293
        %333 = vmatmul.bf16.gmra.mxu0 %v239
        %v334 = vpop.f32.mrf.mxu0
        %v335 = vadd.f32 %v241, %v334
        %v336 = vpop.f32.mrf.mxu0
        %337 = vdwg.mxu0
        %338 = vmatpush.bf16.msra.mxu0 %v308
        %339 = vmatpush.bf16.msra.mxu0 %v306
        %340 = vmatpush.bf16.msra.mxu0 %v304
        %341 = vmatpush.bf16.msra.mxu0 %v302
        %342 = vmatpush.bf16.msra.mxu0 %v300
        %343 = vmatpush.bf16.msra.mxu0 %v298
        %344 = vmatpush.bf16.msra.mxu0 %v296
        %345 = vmatpush.bf16.msra.mxu0 %v294
        %346 = vmatmul.bf16.gmra.mxu0 %v239
        %v347 = vpop.f32.mrf.mxu0
        %v348 = vadd.f32 %v242, %v347
        %v349 = vpop.f32.mrf.mxu0
        %350 = vdwg.mxu0
        %v351 = vxor.u32 %v348, 2147483648
        %v352 = vmul.f32 %v351, 1.442695
        %v353 = vpow.pop %v352
        %v354 = vadd.f32 %v353, 1.0
        %v355 = vrcp.pop %v354
        %v356 = vmul.f32 %v354, %v355
        %v357 = vsub.f32 1.0, %v356
        %v358 = vmul.f32 %v355, %v357
        %v359 = vadd.f32 %v355, %v358
        %vm360 = vweird.f32 %v354
        %vm361 = vweird.f32 %v355
        %vm362 = vmor %vm360, %vm361
        %v363 = vsel %vm362, %v355, %v359
        %v364 = vand.u32 2147483647, %v354
        %vm365 = vcmp.eq.f32.partialorder %v364, 8.507059e+37
        %v366 = vand.u32 %v354, 2147483648
        %v367 = vor.u32 1.1754944e-38, %v366
        %v368 = vsel %vm365, %v367, %v363
        %v369 = vmul.f32 1.0, %v368
        %v370 = vsub.f32 %v335, %v221
        %v371 = vmul.f32 %v369, %v370
        %v372 = vadd.f32 %v221, %v371
        %s373 = scalar_lea.vmem [#allocation5], 128
        %v374 = vld [vmem:[%s373] sm:$0xff]
        %v375 = vld [vmem:[%s373 + $0x8] sm:$0xff]
        %v376 = vld [vmem:[%s373 + $0x10] sm:$0xff]
        %v377 = vld [vmem:[%s373 + $0x18] sm:$0xff]
        %v378 = vld [vmem:[%s373 + $0x20] sm:$0xff]
        %v379 = vld [vmem:[%s373 + $0x28] sm:$0xff]
        %v380 = vld [vmem:[%s373 + $0x30] sm:$0xff]
        %v381 = vld [vmem:[%s373 + $0x38] sm:$0xff]
        %v382 = vld [vmem:[%s373 + $0x40] sm:$0xff]
        %v383 = vld [vmem:[%s373 + $0x48] sm:$0xff]
        %v384 = vld [vmem:[%s373 + $0x50] sm:$0xff]
        %v385 = vld [vmem:[%s373 + $0x58] sm:$0xff]
        %v386 = vld [vmem:[%s373 + $0x60] sm:$0xff]
        %v387 = vld [vmem:[%s373 + $0x68] sm:$0xff]
        %v388 = vld [vmem:[%s373 + $0x70] sm:$0xff]
        %v389 = vld [vmem:[%s373 + $0x78] sm:$0xff]
        %s390 = scalar_lea.vmem [#allocation7], 2
        %v391 = vld [vmem:[%s390] sm:$0x3]
        %v392 = vpack.c.bf16 %v372, %v372
        %v394 = vperm.slane %v391, 0
        %v395 = vperm.slane %v391, 1
        %v414 = vunpack.c.l.b16 %v374
        %v415 = vunpack.c.h.b16 %v374
        %v416 = vunpack.c.l.b16 %v375
        %v417 = vunpack.c.h.b16 %v375
        %v418 = vunpack.c.l.b16 %v376
        %v419 = vunpack.c.h.b16 %v376
        %v420 = vunpack.c.l.b16 %v377
        %v421 = vunpack.c.h.b16 %v377
        %v422 = vunpack.c.l.b16 %v378
        %v423 = vunpack.c.h.b16 %v378
        %v424 = vunpack.c.l.b16 %v379
        %v425 = vunpack.c.h.b16 %v379
        %v426 = vunpack.c.l.b16 %v380
        %v427 = vunpack.c.h.b16 %v380
        %v428 = vunpack.c.l.b16 %v381
        %v429 = vunpack.c.h.b16 %v381
        %v430 = vunpack.c.l.b16 %v382
        %v431 = vunpack.c.h.b16 %v382
        %v432 = vunpack.c.l.b16 %v383
        %v433 = vunpack.c.h.b16 %v383
        %v434 = vunpack.c.l.b16 %v384
        %v435 = vunpack.c.h.b16 %v384
        %v436 = vunpack.c.l.b16 %v385
        %v437 = vunpack.c.h.b16 %v385
        %v438 = vunpack.c.l.b16 %v386
        %v439 = vunpack.c.h.b16 %v386
        %v440 = vunpack.c.l.b16 %v387
        %v441 = vunpack.c.h.b16 %v387
        %v442 = vunpack.c.l.b16 %v388
        %v443 = vunpack.c.h.b16 %v388
        %v444 = vunpack.c.l.b16 %v389
        %v445 = vunpack.c.h.b16 %v389
        %v446 = vpack.c.b16 %v416, %v414
        %v447 = vpack.c.b16 %v417, %v415
        %v448 = vpack.c.b16 %v420, %v418
        %v449 = vpack.c.b16 %v421, %v419
        %v450 = vpack.c.b16 %v424, %v422
        %v451 = vpack.c.b16 %v425, %v423
        %v452 = vpack.c.b16 %v428, %v426
        %v453 = vpack.c.b16 %v429, %v427
        %v454 = vpack.c.b16 %v432, %v430
        %v455 = vpack.c.b16 %v433, %v431
        %v456 = vpack.c.b16 %v436, %v434
        %v457 = vpack.c.b16 %v437, %v435
        %v458 = vpack.c.b16 %v440, %v438
        %v459 = vpack.c.b16 %v441, %v439
        %v460 = vpack.c.b16 %v444, %v442
        %v461 = vpack.c.b16 %v445, %v443
        %478 = vmatpush.bf16.msra.mxu0 %v460
        %479 = vmatpush.bf16.msra.mxu0 %v458
        %480 = vmatpush.bf16.msra.mxu0 %v456
        %481 = vmatpush.bf16.msra.mxu0 %v454
        %482 = vmatpush.bf16.msra.mxu0 %v452
        %483 = vmatpush.bf16.msra.mxu0 %v450
        %484 = vmatpush.bf16.msra.mxu0 %v448
        %485 = vmatpush.bf16.msra.mxu0 %v446
        %486 = vmatmul.bf16.gmra.mxu0 %v392
        %v487 = vpop.f32.mrf.mxu0
        %v488 = vadd.f32 %v394, %v487
        %v489 = vpop.f32.mrf.mxu0
        %490 = vdwg.mxu0
        %491 = vmatpush.bf16.msra.mxu0 %v461
        %492 = vmatpush.bf16.msra.mxu0 %v459
        %493 = vmatpush.bf16.msra.mxu0 %v457
        %494 = vmatpush.bf16.msra.mxu0 %v455
        %495 = vmatpush.bf16.msra.mxu0 %v453
        %496 = vmatpush.bf16.msra.mxu0 %v451
        %497 = vmatpush.bf16.msra.mxu0 %v449
        %498 = vmatpush.bf16.msra.mxu0 %v447
        %499 = vmatmul.bf16.gmra.mxu0 %v392
        %v500 = vpop.f32.mrf.mxu0
        %v501 = vadd.f32 %v395, %v500
        %v502 = vpop.f32.mrf.mxu0
        %503 = vdwg.mxu0
        %v504 = vxor.u32 %v501, 2147483648
        %v505 = vmul.f32 %v504, 1.442695
        %v506 = vpow.pop %v505
        %v507 = vadd.f32 %v506, 1.0
        %v508 = vrcp.pop %v507
        %v509 = vmul.f32 %v507, %v508
        %v510 = vsub.f32 1.0, %v509
        %v511 = vmul.f32 %v508, %v510
        %v512 = vadd.f32 %v508, %v511
        %vm513 = vweird.f32 %v507
        %vm514 = vweird.f32 %v508
        %vm515 = vmor %vm513, %vm514
        %v516 = vsel %vm515, %v508, %v512
        %v517 = vand.u32 2147483647, %v507
        %vm518 = vcmp.eq.f32.partialorder %v517, 8.507059e+37
        %v519 = vand.u32 %v507, 2147483648
        %v520 = vor.u32 1.1754944e-38, %v519
        %v521 = vsel %vm518, %v520, %v516
        %v522 = vmul.f32 1.0, %v521
        %v523 = vsub.f32 %v488, %v372
        %v524 = vmul.f32 %v522, %v523
        %v525 = vadd.f32 %v372, %v524
        %526 = vst [vmem:[%s220] sm:$0xff] %v525
        %s527 = sand.u32 %s97, 1
        %s528 = scalar_lea.sflag [#allocation4], %s527
        %s529 = sand.u32 %s97, 1
        %s530 = smul.addr %s529, 8
        %s531 = scalar_lea.vmem [#allocation8], %s530
        // Predicated region
        $region45: #{tpu_custom_call.1} parent=31 // pred_check
          %p532 = pneg %p107
        $region46: #{tpu_custom_call.1} parent=31 // pred_check_branch
          %534 = sbr.rel (%p532) target = $region48
        $region47: #{tpu_custom_call.1} parent=31 // pred_region
          %536 = vsyncadd %s528, 0
          %s537 = smul.addr %s21, 8
          %s538 = scalar_lea.hbm %s3, %s537
          %s540 = sshll.u32 %s531, 4
          %s541 = int_to_ptr.vmem [resolvable:$true] %s540
          %s542 = sshll.u32 %s538, 4
          %s543 = int_to_ptr.hbm [resolvable:$true] %s542
          %545 = dma.vmem_to_hbm [thread:$0]  %s541, 128, %s543, %s528
        $region48: #{tpu_custom_call.1} parent=31 // pred_fallthru
          _
      $region32: #{tpu_custom_call.1} parent=5 // pred_fallthru
        _
      %p546 = scmp.le.s32.totalorder 2, %s16
      // Predicated region
      $region49: #{tpu_custom_call.1} parent=5 // pred_check
        %p547 = pneg %p546
      $region50: #{tpu_custom_call.1} parent=5 // pred_check_branch
        %549 = sbr.rel (%p547) target = $region52
      $region51: #{tpu_custom_call.1} parent=5 // pred_region
        %s550 = ssub.s32 %s16, 2
        // Predicated region
        $region53: #{tpu_custom_call.1} parent=51 // pred_check
          %p551 = pneg %p113
        $region54: #{tpu_custom_call.1} parent=51 // pred_check_branch
          %553 = sbr.rel (%p551) target = $region56
        $region55: #{tpu_custom_call.1} parent=51 // pred_region
          %s554 = sand.u32 %s98, 1
          %s555 = scalar_lea.sflag [#allocation4], %s554
          %s556 = sand.u32 %s98, 1
          %s557 = smul.addr %s556, 8
          %s558 = scalar_lea.vmem [#allocation8], %s557
          %560 = dma.done %s555, 128
        $region56: #{tpu_custom_call.1} parent=51 // pred_fallthru
          _
      $region52: #{tpu_custom_call.1} parent=5 // pred_fallthru
        _
    $region6: #{tpu_custom_call.1} parent=1 // loop_footer
      %s20 = sadd.s32 1, %s16
    $region7: #{tpu_custom_call.1} parent=1 // loop_footer_branch
      %15 = sbr.rel target = $region3
    $region8: #{tpu_custom_call.1} parent=1 // loop_exit
      _
    %561 = vsyncpa [#allocation3], 1
    %s562 = scalar_lea.sflag [#allocation3], 1
    %563 = vsyncpa %s562, 1
    %564 = vsyncpa [#allocation6], 1
    %565 = vsyncpa [#allocation4], 1
    %s566 = scalar_lea.sflag [#allocation4], 1
    %567 = vsyncpa %s566, 1

</llo_original>
